<compile_context>
chip_gen: v5e
topology: v5e:2x2
jax: 0.10.0
libtpu: 0.0.40
codegen_flags: <defaults>
</compile_context>

<pallas_src>
import functools

import jax
import jax.numpy as jnp
from jax.experimental import pallas as pl
from jax.experimental.pallas import tpu as pltpu

HIDDEN = 128


# ----------------------------------------------------------------------------
# Shared fused MLP body (bf16 MXU operands, f32 accumulate / elementwise).
# ----------------------------------------------------------------------------
def _fused_body(x_ref, w_feat_ref, b_feat_ref, w_va1_ref, b_va1_ref,
                w_out_ref, b_out_ref):
    # feature: Linear(input_dim, 128) + ReLU
    x = x_ref[...].astype(jnp.bfloat16)
    h = jnp.dot(x, w_feat_ref[...], preferred_element_type=jnp.float32)
    h = jnp.maximum(h + b_feat_ref[...], 0.0)                       # [B, 128] f32

    # fused hidden layer of both streams: NoisyLinear(128,128) x2 + ReLU,
    # one N=256 matmul (cols 0..127 = value hidden, cols 128..255 = adv hidden)
    va = jnp.dot(h.astype(jnp.bfloat16), w_va1_ref[...],
                 preferred_element_type=jnp.float32)
    va = jnp.maximum(va + b_va1_ref[...], 0.0)                      # [B, 256] f32

    # fused output heads: block-diagonal [256, 128] weight.
    #   lanes 0..A-1 -> advantage, lane 127 -> value, lanes A..126 -> exactly 0
    out = jnp.dot(va.astype(jnp.bfloat16), w_out_ref[...],
                  preferred_element_type=jnp.float32)
    return out + b_out_ref[...]                                     # [B, 128] f32


# ----------------------------------------------------------------------------
# Kernel 1: whole batch in one VMEM-resident tile (small B, no grid).
# ----------------------------------------------------------------------------
def dueling_dqn_kernel(x_ref, w_feat_ref, b_feat_ref, w_va1_ref, b_va1_ref,
                       w_out_ref, b_out_ref, q_ref, *, actions):
    out = _fused_body(x_ref, w_feat_ref, b_feat_ref, w_va1_ref, b_va1_ref,
                      w_out_ref, b_out_ref)
    b, n = out.shape
    value = out[:, n - 1:n]                                         # [B, 1]
    # PyTorch `advantage.mean()` (no dim): lanes A..126 are exactly zero by
    # construction, so only the value lane has to be excluded from the sum.
    adv_mean = (jnp.sum(out) - jnp.sum(value)) * (1.0 / (b * actions))
    # lanes 0..A-1: value + adv - mean; other lanes are don't-care (sliced off)
    q_ref[...] = value + out - adv_mean


# ----------------------------------------------------------------------------
# Kernel 2: batch-tiled grid; emits raw fused output tiles (two-pass mean).
# ----------------------------------------------------------------------------
def dueling_dqn_tiled_kernel(x_ref, w_feat_ref, b_feat_ref, w_va1_ref,
                             b_va1_ref, w_out_ref, b_out_ref, out_ref):
    out_ref[...] = _fused_body(x_ref, w_feat_ref, b_feat_ref, w_va1_ref,
                               b_va1_ref, w_out_ref, b_out_ref)


def _cost(b, f):
    matmul_elems = f * HIDDEN + HIDDEN * 2 * HIDDEN + 2 * HIDDEN * HIDDEN
    flops = 2 * b * matmul_elems
    bytes_accessed = (
        4 * b * f                     # x (f32)
        + 2 * matmul_elems            # bf16 weights
        + 4 * (HIDDEN + 2 * HIDDEN + HIDDEN)  # f32 biases
        + 4 * b * HIDDEN              # output tile
    )
    return pl.CostEstimate(flops=flops, transcendentals=0,
                           bytes_accessed=bytes_accessed)


def dueling_dqn_forward(x, fused, action_dim, *, block_b=None):
    """Run the Pallas kernel(s). x: [B, input_dim] float32. Returns [B, A].

    block_b=None  -> single VMEM-resident tile (small batches).
    block_b=int   -> 1-D batch grid with resident weights; the global
                     advantage mean is applied in a cheap wrapper op.
    """
    B, F = x.shape

    if block_b is None:
        # Small-batch path: one tile, mean computed in-kernel (exact).
        kernel = functools.partial(dueling_dqn_kernel, actions=action_dim)
        vmem = pl.BlockSpec(memory_space=pltpu.MemorySpace.VMEM)
        q = pl.pallas_call(
            kernel,
            out_shape=jax.ShapeDtypeStruct((B, HIDDEN), jnp.float32),
            in_specs=[vmem] * 7,
            out_specs=vmem,
            cost_estimate=_cost(B, F),
        )(
            x,
            fused["w_feat"], fused["b_feat"],
            fused["w_va1"], fused["b_va1"],
            fused["w_out"], fused["b_out"],
        )
        return q[:, :action_dim]

    # Tiled path: x / out tiled along batch, weights resident across steps.
    num_tiles = pl.cdiv(B, block_b)
    wfull = lambda i: (0, 0)
    out_raw = pl.pallas_call(
        dueling_dqn_tiled_kernel,
        out_shape=jax.ShapeDtypeStruct((B, HIDDEN), jnp.float32),
        grid=(num_tiles,),
        in_specs=[
            pl.BlockSpec((block_b, F), lambda i: (i, 0)),
            pl.BlockSpec((F, HIDDEN), wfull),
            pl.BlockSpec((1, HIDDEN), wfull),
            pl.BlockSpec((HIDDEN, 2 * HIDDEN), wfull),
            pl.BlockSpec((1, 2 * HIDDEN), wfull),
            pl.BlockSpec((2 * HIDDEN, HIDDEN), wfull),
            pl.BlockSpec((1, HIDDEN), wfull),
        ],
        out_specs=pl.BlockSpec((block_b, HIDDEN), lambda i: (i, 0)),
        compiler_params=pltpu.CompilerParams(
            dimension_semantics=("parallel",)),   # v7x: shard tiles over 2 TCs
        cost_estimate=_cost(B, F),
    )(
        x,
        fused["w_feat"], fused["b_feat"],
        fused["w_va1"], fused["b_va1"],
        fused["w_out"], fused["b_out"],
    )
    # Two-pass global mean (PyTorch `.mean()` couples all rows, so it cannot
    # be done per tile).  out_raw has exactly B rows; lanes A..126 are zero.
    value = out_raw[:, HIDDEN - 1:HIDDEN]
    adv = out_raw[:, :action_dim]
    adv_mean = jnp.mean(adv)
    return value + adv - adv_mean


# ----------------------------------------------------------------------------
# Deterministic parameter construction (mirrors PyTorch init semantics).
# ----------------------------------------------------------------------------
def _scale_noise(key, size):
    x = jax.random.normal(key, (size,), dtype=jnp.float32)
    return jnp.sign(x) * jnp.sqrt(jnp.abs(x))


def _noisy_linear_params(key, in_features, out_features, sigma_init=0.5):
    """Return effective (training-mode) weight/bias, transposed to [in, out]."""
    k_mu_w, k_mu_b, k_eps_in, k_eps_out = jax.random.split(key, 4)
    mu_range = 1.0 / jnp.sqrt(jnp.float32(in_features))

    weight_mu = jax.random.uniform(
        k_mu_w, (out_features, in_features), jnp.float32, -mu_range, mu_range)
    bias_mu = jax.random.uniform(
        k_mu_b, (out_features,), jnp.float32, -mu_range, mu_range)
    weight_sigma = jnp.full((out_features, in_features),
                            sigma_init * mu_range, jnp.float32)
    bias_sigma = jnp.full((out_features,), sigma_init * mu_range, jnp.float32)

    eps_in = _scale_noise(k_eps_in, in_features)
    eps_out = _scale_noise(k_eps_out, out_features)
    weight_eps = jnp.outer(eps_out, eps_in)
    bias_eps = eps_out

    w_eff = weight_mu + weight_sigma * weight_eps     # [out, in]
    b_eff = bias_mu + bias_sigma * bias_eps           # [out]
    return w_eff.T, b_eff.reshape(1, out_features)    # [in, out], [1, out]


def _linear_params(key, in_features, out_features):
    k_w, k_b = jax.random.split(key)
    bound = 1.0 / jnp.sqrt(jnp.float32(in_features))
    w = jax.random.uniform(k_w, (out_features, in_features),
                           jnp.float32, -bound, bound)
    b = jax.random.uniform(k_b, (out_features,), jnp.float32, -bound, bound)
    return w.T, b.reshape(1, out_features)


def make_params(key, input_dim, action_dim):
    """Raw (unfused) parameters, matching the PyTorch module layer by layer."""
    k_feat, k_v1, k_v2, k_a1, k_a2 = jax.random.split(key, 5)
    w_feat, b_feat = _linear_params(k_feat, input_dim, HIDDEN)
    w_v1, b_v1 = _noisy_linear_params(k_v1, HIDDEN, HIDDEN)
    w_v2, b_v2 = _noisy_linear_params(k_v2, HIDDEN, 1)
    w_a1, b_a1 = _noisy_linear_params(k_a1, HIDDEN, HIDDEN)
    w_a2, b_a2 = _noisy_linear_params(k_a2, HIDDEN, action_dim)
    return dict(w_feat=w_feat, b_feat=b_feat,
                w_v1=w_v1, b_v1=b_v1, w_v2=w_v2, b_v2=b_v2,
                w_a1=w_a1, b_a1=b_a1, w_a2=w_a2, b_a2=b_a2)


def fuse_params(p, action_dim):
    """Build the MXU-friendly fused weights (done once, outside the kernel).

    Matmul weights are stored bf16 (MXU-native on v6e/v7x, halves weight DMA);
    biases stay f32 so bias-add / ReLU / mean remain f32 on every generation.
    """
    assert action_dim <= HIDDEN - 1, "action_dim must leave lane 127 for value"
    # hidden layers of both streams side by side -> one N=256 matmul
    w_va1 = jnp.concatenate([p["w_v1"], p["w_a1"]], axis=1)     # [128, 256]
    b_va1 = jnp.concatenate([p["b_v1"], p["b_a1"]], axis=1)     # [1, 256]

    # block-diagonal output head, lane-dense to 128:
    #   rows 0..127 (value hidden)  -> lane 127 via w_v2
    #   rows 128..255 (adv hidden)  -> lanes 0..A-1 via w_a2
    # NOTE: lanes A..126 must stay exactly zero (the in-kernel mean relies on it).
    w_out = jnp.zeros((2 * HIDDEN, HIDDEN), jnp.float32)
    w_out = w_out.at[HIDDEN:, :action_dim].set(p["w_a2"])
    w_out = w_out.at[:HIDDEN, HIDDEN - 1].set(p["w_v2"][:, 0])
    b_out = jnp.zeros((1, HIDDEN), jnp.float32)
    b_out = b_out.at[0, :action_dim].set(p["b_a2"][0])
    b_out = b_out.at[0, HIDDEN - 1].set(p["b_v2"][0, 0])        # b_v2 folded in

    return dict(w_feat=p["w_feat"].astype(jnp.bfloat16), b_feat=p["b_feat"],
                w_va1=w_va1.astype(jnp.bfloat16), b_va1=b_va1,
                w_out=w_out.astype(jnp.bfloat16), b_out=b_out)


def reference_forward(x, p):
    """Pure-JAX f32 reference of DuelingDQN.forward (unfused) for correctness."""
    h = jnp.maximum(x @ p["w_feat"] + p["b_feat"], 0.0)
    v1 = jnp.maximum(h @ p["w_v1"] + p["b_v1"], 0.0)
    value = v1 @ p["w_v2"] + p["b_v2"]
    a1 = jnp.maximum(h @ p["w_a1"] + p["b_a1"], 0.0)
    adv = a1 @ p["w_a2"] + p["b_a2"]
    return value + adv - jnp.mean(adv)


if __name__ == "__main__":
    key = jax.random.PRNGKey(0)
    k_x, k_p, k_x2 = jax.random.split(key, 3)

    batch, input_dim, action_dim = 8, 32, 8
    x = jax.random.normal(k_x, (batch, input_dim), dtype=jnp.float32)
    params = make_params(k_p, input_dim, action_dim)
    fused = fuse_params(params, action_dim)

    # Small-batch single-tile path.
    q = dueling_dqn_forward(x, fused, action_dim)
    q = jax.block_until_ready(q)
    q_ref = reference_forward(x, params)
    assert q.shape == (batch, action_dim)
    # bf16 matmul operands vs. f32 reference -> loosened tolerance.
    assert jnp.allclose(q, q_ref, atol=5e-2, rtol=5e-2), "small-batch mismatch"

    # Batch-tiled path (grid + resident weights + two-pass global mean).
    big_batch, tile_b = 1024, 256
    x_big = jax.random.normal(k_x2, (big_batch, input_dim), dtype=jnp.float32)
    q_big = dueling_dqn_forward(x_big, fused, action_dim, block_b=tile_b)
    q_big = jax.block_until_ready(q_big)
    q_big_ref = reference_forward(x_big, params)
    assert q_big.shape == (big_batch, action_dim)
    assert jnp.allclose(q_big, q_big_ref, atol=5e-2, rtol=5e-2), "tiled mismatch"

    print("KERNEL_OK")
</pallas_src>

<mosaic_0001>
module attributes {stable_mosaic.version = 11 : i64} {
  func.func @dueling_dqn_kernel(%arg0: memref<8x32xf32, #tpu.memory_space<vmem>>, %arg1: memref<32x128xbf16, #tpu.memory_space<vmem>>, %arg2: memref<1x128xf32, #tpu.memory_space<vmem>>, %arg3: memref<128x256xbf16, #tpu.memory_space<vmem>>, %arg4: memref<1x256xf32, #tpu.memory_space<vmem>>, %arg5: memref<256x128xbf16, #tpu.memory_space<vmem>>, %arg6: memref<1x128xf32, #tpu.memory_space<vmem>>, %arg7: memref<8x128xf32, #tpu.memory_space<vmem>>) attributes {dimension_semantics = [], scalar_prefetch = 0 : i64, scratch_operands = 0 : i64, tpu.core_type = #tpu.core_type<tc>} {
    %c0 = arith.constant 0 : index
    %c0_0 = arith.constant 0 : index
    %0 = vector.load %arg0[%c0, %c0_0] : memref<8x32xf32, #tpu.memory_space<vmem>>, vector<8x32xf32>
    %1 = arith.truncf %0 : vector<8x32xf32> to vector<8x32xbf16>
    %c0_1 = arith.constant 0 : index
    %c0_2 = arith.constant 0 : index
    %2 = vector.load %arg1[%c0_1, %c0_2] : memref<32x128xbf16, #tpu.memory_space<vmem>>, vector<32x128xbf16>
    %cst = arith.constant dense<0.000000e+00> : vector<8x128xf32>
    %3 = tpu.matmul %1, %2, %cst {dimension_numbers = #tpu.dot_dimension_numbers<[1], [0], [0], [1], [0, 0, 1, 1], [], []>} : vector<8x32xbf16>, vector<32x128xbf16>, vector<8x128xf32> -> vector<8x128xf32>
    %c0_3 = arith.constant 0 : index
    %c0_4 = arith.constant 0 : index
    %4 = vector.load %arg2[%c0_3, %c0_4] : memref<1x128xf32, #tpu.memory_space<vmem>>, vector<1x128xf32>
    %5 = vector.broadcast %4 : vector<1x128xf32> to vector<8x128xf32>
    %6 = arith.addf %3, %5 : vector<8x128xf32>
    %cst_5 = arith.constant 0.000000e+00 : f32
    %7 = vector.broadcast %cst_5 : f32 to vector<8x128xf32>
    %8 = arith.maximumf %6, %7 : vector<8x128xf32>
    %9 = arith.truncf %8 : vector<8x128xf32> to vector<8x128xbf16>
    %c0_6 = arith.constant 0 : index
    %c0_7 = arith.constant 0 : index
    %10 = vector.load %arg3[%c0_6, %c0_7] : memref<128x256xbf16, #tpu.memory_space<vmem>>, vector<128x256xbf16>
    %cst_8 = arith.constant dense<0.000000e+00> : vector<8x256xf32>
    %11 = tpu.matmul %9, %10, %cst_8 {dimension_numbers = #tpu.dot_dimension_numbers<[1], [0], [0], [1], [0, 0, 1, 1], [], []>} : vector<8x128xbf16>, vector<128x256xbf16>, vector<8x256xf32> -> vector<8x256xf32>
    %c0_9 = arith.constant 0 : index
    %c0_10 = arith.constant 0 : index
    %12 = vector.load %arg4[%c0_9, %c0_10] : memref<1x256xf32, #tpu.memory_space<vmem>>, vector<1x256xf32>
    %13 = vector.broadcast %12 : vector<1x256xf32> to vector<8x256xf32>
    %14 = arith.addf %11, %13 : vector<8x256xf32>
    %cst_11 = arith.constant 0.000000e+00 : f32
    %15 = vector.broadcast %cst_11 : f32 to vector<8x256xf32>
    %16 = arith.maximumf %14, %15 : vector<8x256xf32>
    %17 = arith.truncf %16 : vector<8x256xf32> to vector<8x256xbf16>
    %c0_12 = arith.constant 0 : index
    %c0_13 = arith.constant 0 : index
    %18 = vector.load %arg5[%c0_12, %c0_13] : memref<256x128xbf16, #tpu.memory_space<vmem>>, vector<256x128xbf16>
    %cst_14 = arith.constant dense<0.000000e+00> : vector<8x128xf32>
    %19 = tpu.matmul %17, %18, %cst_14 {dimension_numbers = #tpu.dot_dimension_numbers<[1], [0], [0], [1], [0, 0, 1, 1], [], []>} : vector<8x256xbf16>, vector<256x128xbf16>, vector<8x128xf32> -> vector<8x128xf32>
    %c0_15 = arith.constant 0 : index
    %c0_16 = arith.constant 0 : index
    %20 = vector.load %arg6[%c0_15, %c0_16] : memref<1x128xf32, #tpu.memory_space<vmem>>, vector<1x128xf32>
    %21 = vector.broadcast %20 : vector<1x128xf32> to vector<8x128xf32>
    %22 = arith.addf %19, %21 : vector<8x128xf32>
    %23 = vector.extract_strided_slice %22 {offsets = [0, 127], sizes = [8, 1], strides = [1, 1]} : vector<8x128xf32> to vector<8x1xf32>
    %24 = vector.shape_cast %22 : vector<8x128xf32> to vector<1x8x128xf32>
    %cst_17 = arith.constant dense<0.000000e+00> : vector<1xf32>
    %25 = vector.multi_reduction <add>, %24, %cst_17 [1, 2] : vector<1x8x128xf32> to vector<1xf32>
    %26 = vector.shape_cast %25 : vector<1xf32> to vector<1x1x1xf32>
    %27 = vector.extract %26[0, 0, 0] : f32 from vector<1x1x1xf32>
    %28 = vector.shape_cast %23 : vector<8x1xf32> to vector<1x8x1xf32>
    %cst_18 = arith.constant dense<0.000000e+00> : vector<1xf32>
    %29 = vector.multi_reduction <add>, %28, %cst_18 [1, 2] : vector<1x8x1xf32> to vector<1xf32>
    %30 = vector.shape_cast %29 : vector<1xf32> to vector<1x1x1xf32>
    %31 = vector.extract %30[0, 0, 0] : f32 from vector<1x1x1xf32>
    %32 = arith.subf %27, %31 : f32
    %cst_19 = arith.constant 1.562500e-02 : f32
    %33 = arith.mulf %32, %cst_19 : f32
    %34 = vector.broadcast %23 : vector<8x1xf32> to vector<8x128xf32>
    %35 = arith.addf %34, %22 : vector<8x128xf32>
    %36 = vector.broadcast %33 : f32 to vector<8x128xf32>
    %37 = arith.subf %35, %36 : vector<8x128xf32>
    %c0_20 = arith.constant 0 : index
    %c0_21 = arith.constant 0 : index
    %38 = vector.load %arg7[%c0_20, %c0_21] : memref<8x128xf32, #tpu.memory_space<vmem>>, vector<8x128xf32>
    tpu.vector_store %arg7[%c0_20, %c0_21], %37 {strides = array<i32>} : memref<8x128xf32, #tpu.memory_space<vmem>>, vector<8x128xf32>,
    return
  }
}

</mosaic_0001>

<llo_original>
// kernel: tpu_custom_call.1
$region0: #{tpu_custom_call.1}
  #allocation0 [shape = 'u32[]', space=smem, size = 0x4, offset = 0x4, fixed_abs, tag = 'smem constant byte address 0x4 - core index']
  #allocation1 [shape = 'u32[72,128]{1,0:T(1,128)}', space=vmem, size = 0x9000, scoped, tag = 'internal scratch']
  %s0 = inlined_call_operand.hbm [shape: f32[8,32], index: 0, kind: input, shape index: {}]
  %s1 = inlined_call_operand.hbm [shape: bf16[32,128], index: 1, kind: input, shape index: {}]
  %s2 = inlined_call_operand.vmem [shape: f32[1,128], index: 2, kind: input, shape index: {}]
  %s3 = inlined_call_operand.hbm [shape: bf16[128,256], index: 3, kind: input, shape index: {}]
  %s4 = inlined_call_operand.vmem [shape: f32[1,256], index: 4, kind: input, shape index: {}]
  %s5 = inlined_call_operand.hbm [shape: bf16[256,128], index: 5, kind: input, shape index: {}]
  %s6 = inlined_call_operand.vmem [shape: f32[1,128], index: 6, kind: input, shape index: {}]
  %s7 = inlined_call_operand.hbm [shape: f32[8,128], index: 7, kind: output, shape index: {}]
  %s8 = sld [smem:[#allocation0]]
  $region54: #{tpu_custom_call.1} parent=0
    _
  %s10 = ssub.s32 1, %s8
  %s11 = scalar_select 0, %s10, %s8
  $region1: #{tpu_custom_call.1} parent=0
    #allocation2 [shape = 'u8[4096]{0}', space=vmem, size = 0x1000, scoped, tag = 'input window, operand 0, single buffered']
    #allocation3 [shape = 's32[1]{0}', space=sflag, size = 0x4, scoped, tag = 'scoped memory for tpu_custom_call.1']
    #allocation4 [shape = 's32[1]{0}', space=sflag, size = 0x4, scoped, tag = 'scoped memory for tpu_custom_call.1']
    #allocation5 [shape = 'u8[8192]{0}', space=vmem, size = 0x2000, scoped, tag = 'input window, operand 1, single buffered']
    #allocation6 [shape = 's32[1]{0}', space=sflag, size = 0x4, scoped, tag = 'scoped memory for tpu_custom_call.1']
    #allocation7 [shape = 'u8[65536]{0}', space=vmem, size = 0x10000, scoped, tag = 'input window, operand 3, single buffered']
    #allocation8 [shape = 'u8[65536]{0}', space=vmem, size = 0x10000, scoped, tag = 'input window, operand 5, single buffered']
    #allocation9 [shape = 's32[1]{0}', space=sflag, size = 0x4, scoped, tag = 'scoped memory for tpu_custom_call.1']
    #allocation10 [shape = 'u8[4096]{0}', space=vmem, size = 0x1000, scoped, tag = 'output window, operand 0, single buffered']
    %12 = vsyncpa [#allocation3], 0
    %13 = vsyncpa [#allocation6], 0
    %14 = vsyncpa [#allocation9], 0
    %15 = vsyncpa [#allocation4], 0
    // Predicated region
    $region2: #{tpu_custom_call.1} parent=1 // pred_check
      _
    $region3: #{tpu_custom_call.1} parent=1 // pred_check_branch
      %17 = sbr.rel (0) target = $region5
    $region4: #{tpu_custom_call.1} parent=1 // pred_region
      %19 = vsyncadd [#allocation3], 0
      %s21 = sshll.u32 %s0, 4
      %s22 = int_to_ptr.hbm [resolvable:$true] %s21
      %s23 = sshll.u32 [#allocation2], 4
      %s24 = int_to_ptr.vmem [resolvable:$true] %s23
      %26 = dma.hbm_to_vmem [thread:$0]  %s22, 128, %s24, [#allocation3]
    $region5: #{tpu_custom_call.1} parent=1 // pred_fallthru
      _
    // Predicated region
    $region6: #{tpu_custom_call.1} parent=1 // pred_check
      _
    $region7: #{tpu_custom_call.1} parent=1 // pred_check_branch
      %28 = sbr.rel (0) target = $region9
    $region8: #{tpu_custom_call.1} parent=1 // pred_region
      %30 = vsyncadd [#allocation6], 0
      %s31 = sshll.u32 %s1, 4
      %s32 = int_to_ptr.hbm [resolvable:$true] %s31
      %s33 = sshll.u32 [#allocation5], 4
      %s34 = int_to_ptr.vmem [resolvable:$true] %s33
      %39 = dma.hbm_to_vmem [thread:$0]  %s32, 256, %s34, [#allocation6], 64, 64, 4
    $region9: #{tpu_custom_call.1} parent=1 // pred_fallthru
      _
    // Predicated region
    $region10: #{tpu_custom_call.1} parent=1 // pred_check
      _
    $region11: #{tpu_custom_call.1} parent=1 // pred_check_branch
      %41 = sbr.rel (0) target = $region13
    $region12: #{tpu_custom_call.1} parent=1 // pred_region
      _
    $region13: #{tpu_custom_call.1} parent=1 // pred_fallthru
      _
    // Predicated region
    $region14: #{tpu_custom_call.1} parent=1 // pred_check
      _
    $region15: #{tpu_custom_call.1} parent=1 // pred_check_branch
      %43 = sbr.rel (0) target = $region17
    $region16: #{tpu_custom_call.1} parent=1 // pred_region
      %45 = vsyncadd [#allocation6], 0
      %s46 = sshll.u32 %s3, 4
      %s47 = int_to_ptr.hbm [resolvable:$true] %s46
      %s48 = sshll.u32 [#allocation7], 4
      %s49 = int_to_ptr.vmem [resolvable:$true] %s48
      %54 = dma.hbm_to_vmem [thread:$0]  %s47, 2048, %s49, [#allocation6], 128, 128, 8
    $region17: #{tpu_custom_call.1} parent=1 // pred_fallthru
      _
    // Predicated region
    $region18: #{tpu_custom_call.1} parent=1 // pred_check
      _
    $region19: #{tpu_custom_call.1} parent=1 // pred_check_branch
      %56 = sbr.rel (0) target = $region21
    $region20: #{tpu_custom_call.1} parent=1 // pred_region
      _
    $region21: #{tpu_custom_call.1} parent=1 // pred_fallthru
      _
    // Predicated region
    $region22: #{tpu_custom_call.1} parent=1 // pred_check
      _
    $region23: #{tpu_custom_call.1} parent=1 // pred_check_branch
      %58 = sbr.rel (0) target = $region25
    $region24: #{tpu_custom_call.1} parent=1 // pred_region
      %60 = vsyncadd [#allocation9], 0
      %s61 = sshll.u32 %s5, 4
      %s62 = int_to_ptr.hbm [resolvable:$true] %s61
      %s63 = sshll.u32 [#allocation8], 4
      %s64 = int_to_ptr.vmem [resolvable:$true] %s63
      %69 = dma.hbm_to_vmem [thread:$0]  %s62, 2048, %s64, [#allocation9], 64, 64, 4
    $region25: #{tpu_custom_call.1} parent=1 // pred_fallthru
      _
    // Predicated region
    $region26: #{tpu_custom_call.1} parent=1 // pred_check
      _
    $region27: #{tpu_custom_call.1} parent=1 // pred_check_branch
      %71 = sbr.rel (0) target = $region29
    $region28: #{tpu_custom_call.1} parent=1 // pred_region
      _
    $region29: #{tpu_custom_call.1} parent=1 // pred_fallthru
      _
    // Predicated region
    $region30: #{tpu_custom_call.1} parent=1 // pred_check
      _
    $region31: #{tpu_custom_call.1} parent=1 // pred_check_branch
      %73 = sbr.rel (0) target = $region33
    $region32: #{tpu_custom_call.1} parent=1 // pred_region
      %75 = dma.done [#allocation3], 128
    $region33: #{tpu_custom_call.1} parent=1 // pred_fallthru
      _
    // Predicated region
    $region34: #{tpu_custom_call.1} parent=1 // pred_check
      _
    $region35: #{tpu_custom_call.1} parent=1 // pred_check_branch
      %77 = sbr.rel (0) target = $region37
    $region36: #{tpu_custom_call.1} parent=1 // pred_region
      %79 = dma.done [#allocation6], 256
    $region37: #{tpu_custom_call.1} parent=1 // pred_fallthru
      _
    // Predicated region
    $region38: #{tpu_custom_call.1} parent=1 // pred_check
      _
    $region39: #{tpu_custom_call.1} parent=1 // pred_check_branch
      %81 = sbr.rel (0) target = $region41
    $region40: #{tpu_custom_call.1} parent=1 // pred_region
      %83 = dma.done [#allocation6], 2048
    $region41: #{tpu_custom_call.1} parent=1 // pred_fallthru
      _
    // Predicated region
    $region42: #{tpu_custom_call.1} parent=1 // pred_check
      _
    $region43: #{tpu_custom_call.1} parent=1 // pred_check_branch
      %85 = sbr.rel (0) target = $region45
    $region44: #{tpu_custom_call.1} parent=1 // pred_region
      %87 = dma.done [#allocation9], 2048
    $region45: #{tpu_custom_call.1} parent=1 // pred_fallthru
      _
    %v89 = vld [vmem:[#allocation2] sm:$0xff]
    %v90 = vpack.c.bf16 %v89, %v89
    %v91 = vld [vmem:[#allocation5] sm:$0xf]
    %v92 = vld [vmem:[#allocation5 + $0x4] sm:$0xf]
    %v93 = vld [vmem:[#allocation5 + $0x8] sm:$0xf]
    %v94 = vld [vmem:[#allocation5 + $0xc] sm:$0xf]
    %v95 = vld [vmem:[%s2] sm:$0x1]
    %v97 = vperm.slane %v95, 0
    %v103 = vunpack.c.l.b16 %v91
    %v104 = vunpack.c.l.b16 %v92
    %v105 = vunpack.c.l.b16 %v93
    %v106 = vunpack.c.l.b16 %v94
    %v107 = vpack.c.b16 %v104, %v103
    %v108 = vpack.c.b16 %v106, %v105
    %vm111 = vcmask 261120
    %v113 = vsel %vm111, %v90, 0
    %115 = vmatpush.bf16.msra.mxu0 0
    %116 = vmatpush.bf16.msra.mxu0 0
    %117 = vmatpush.bf16.msra.mxu0 0
    %118 = vmatpush.bf16.msra.mxu0 0
    %119 = vmatpush.bf16.msra.mxu0 0
    %120 = vmatpush.bf16.msra.mxu0 0
    %121 = vmatpush.bf16.msra.mxu0 %v108
    %122 = vmatpush.bf16.msra.mxu0 %v107
    %123 = vmatmul.bf16.gmra.mxu0 %v113
    %v124 = vpop.f32.mrf.mxu0
    %v125 = vadd.f32 %v97, %v124
    %v126 = vpop.f32.mrf.mxu0
    %127 = vdwg.mxu0
    %v128 = vmax.f32 %v125, 0.0
    %v129 = vpack.c.bf16 %v128, %v128
    %v130 = vld [vmem:[#allocation7] sm:$0xff]
    %v131 = vld [vmem:[#allocation7 + $0x8] sm:$0xff]
    %v132 = vld [vmem:[#allocation7 + $0x10] sm:$0xff]
    %v133 = vld [vmem:[#allocation7 + $0x18] sm:$0xff]
    %v134 = vld [vmem:[#allocation7 + $0x20] sm:$0xff]
    %v135 = vld [vmem:[#allocation7 + $0x28] sm:$0xff]
    %v136 = vld [vmem:[#allocation7 + $0x30] sm:$0xff]
    %v137 = vld [vmem:[#allocation7 + $0x38] sm:$0xff]
    %v138 = vld [vmem:[#allocation7 + $0x40] sm:$0xff]
    %v139 = vld [vmem:[#allocation7 + $0x48] sm:$0xff]
    %v140 = vld [vmem:[#allocation7 + $0x50] sm:$0xff]
    %v141 = vld [vmem:[#allocation7 + $0x58] sm:$0xff]
    %v142 = vld [vmem:[#allocation7 + $0x60] sm:$0xff]
    %v143 = vld [vmem:[#allocation7 + $0x68] sm:$0xff]
    %v144 = vld [vmem:[#allocation7 + $0x70] sm:$0xff]
    %v145 = vld [vmem:[#allocation7 + $0x78] sm:$0xff]
    %v146 = vld [vmem:[%s4] sm:$0x3]
    %v148 = vperm.slane %v146, 0
    %v149 = vperm.slane %v146, 1
    %v168 = vunpack.c.l.b16 %v130
    %v169 = vunpack.c.h.b16 %v130
    %v170 = vunpack.c.l.b16 %v131
    %v171 = vunpack.c.h.b16 %v131
    %v172 = vunpack.c.l.b16 %v132
    %v173 = vunpack.c.h.b16 %v132
    %v174 = vunpack.c.l.b16 %v133
    %v175 = vunpack.c.h.b16 %v133
    %v176 = vunpack.c.l.b16 %v134
    %v177 = vunpack.c.h.b16 %v134
    %v178 = vunpack.c.l.b16 %v135
    %v179 = vunpack.c.h.b16 %v135
    %v180 = vunpack.c.l.b16 %v136
    %v181 = vunpack.c.h.b16 %v136
    %v182 = vunpack.c.l.b16 %v137
    %v183 = vunpack.c.h.b16 %v137
    %v184 = vunpack.c.l.b16 %v138
    %v185 = vunpack.c.h.b16 %v138
    %v186 = vunpack.c.l.b16 %v139
    %v187 = vunpack.c.h.b16 %v139
    %v188 = vunpack.c.l.b16 %v140
    %v189 = vunpack.c.h.b16 %v140
    %v190 = vunpack.c.l.b16 %v141
    %v191 = vunpack.c.h.b16 %v141
    %v192 = vunpack.c.l.b16 %v142
    %v193 = vunpack.c.h.b16 %v142
    %v194 = vunpack.c.l.b16 %v143
    %v195 = vunpack.c.h.b16 %v143
    %v196 = vunpack.c.l.b16 %v144
    %v197 = vunpack.c.h.b16 %v144
    %v198 = vunpack.c.l.b16 %v145
    %v199 = vunpack.c.h.b16 %v145
    %v200 = vpack.c.b16 %v170, %v168
    %v201 = vpack.c.b16 %v171, %v169
    %v202 = vpack.c.b16 %v174, %v172
    %v203 = vpack.c.b16 %v175, %v173
    %v204 = vpack.c.b16 %v178, %v176
    %v205 = vpack.c.b16 %v179, %v177
    %v206 = vpack.c.b16 %v182, %v180
    %v207 = vpack.c.b16 %v183, %v181
    %v208 = vpack.c.b16 %v186, %v184
    %v209 = vpack.c.b16 %v187, %v185
    %v210 = vpack.c.b16 %v190, %v188
    %v211 = vpack.c.b16 %v191, %v189
    %v212 = vpack.c.b16 %v194, %v192
    %v213 = vpack.c.b16 %v195, %v193
    %v214 = vpack.c.b16 %v198, %v196
    %v215 = vpack.c.b16 %v199, %v197
    %232 = vmatpush.bf16.msra.mxu0 %v214
    %233 = vmatpush.bf16.msra.mxu0 %v212
    %234 = vmatpush.bf16.msra.mxu0 %v210
    %235 = vmatpush.bf16.msra.mxu0 %v208
    %236 = vmatpush.bf16.msra.mxu0 %v206
    %237 = vmatpush.bf16.msra.mxu0 %v204
    %238 = vmatpush.bf16.msra.mxu0 %v202
    %239 = vmatpush.bf16.msra.mxu0 %v200
    %240 = vmatmul.bf16.gmra.mxu0 %v129
    %v241 = vpop.f32.mrf.mxu0
    %v242 = vadd.f32 %v148, %v241
    %v243 = vpop.f32.mrf.mxu0
    %244 = vdwg.mxu0
    %245 = vmatpush.bf16.msra.mxu0 %v215
    %246 = vmatpush.bf16.msra.mxu0 %v213
    %247 = vmatpush.bf16.msra.mxu0 %v211
    %248 = vmatpush.bf16.msra.mxu0 %v209
    %249 = vmatpush.bf16.msra.mxu0 %v207
    %250 = vmatpush.bf16.msra.mxu0 %v205
    %251 = vmatpush.bf16.msra.mxu0 %v203
    %252 = vmatpush.bf16.msra.mxu0 %v201
    %253 = vmatmul.bf16.gmra.mxu0 %v129
    %v254 = vpop.f32.mrf.mxu0
    %v255 = vadd.f32 %v149, %v254
    %v256 = vpop.f32.mrf.mxu0
    %257 = vdwg.mxu0
    %v258 = vmax.f32 %v242, 0.0
    %v259 = vmax.f32 %v255, 0.0
    %v260 = vpack.c.bf16 %v258, %v258
    %v261 = vpack.c.bf16 %v259, %v259
    %v262 = vld [vmem:[#allocation8] sm:$0xf]
    %v263 = vld [vmem:[#allocation8 + $0x4] sm:$0xf]
    %v264 = vld [vmem:[#allocation8 + $0x8] sm:$0xf]
    %v265 = vld [vmem:[#allocation8 + $0xc] sm:$0xf]
    %v266 = vld [vmem:[#allocation8 + $0x10] sm:$0xf]
    %v267 = vld [vmem:[#allocation8 + $0x14] sm:$0xf]
    %v268 = vld [vmem:[#allocation8 + $0x18] sm:$0xf]
    %v269 = vld [vmem:[#allocation8 + $0x1c] sm:$0xf]
    %v270 = vld [vmem:[#allocation8 + $0x20] sm:$0xf]
    %v271 = vld [vmem:[#allocation8 + $0x24] sm:$0xf]
    %v272 = vld [vmem:[#allocation8 + $0x28] sm:$0xf]
    %v273 = vld [vmem:[#allocation8 + $0x2c] sm:$0xf]
    %v274 = vld [vmem:[#allocation8 + $0x30] sm:$0xf]
    %v275 = vld [vmem:[#allocation8 + $0x34] sm:$0xf]
    %v276 = vld [vmem:[#allocation8 + $0x38] sm:$0xf]
    %v277 = vld [vmem:[#allocation8 + $0x3c] sm:$0xf]
    %v278 = vld [vmem:[#allocation8 + $0x40] sm:$0xf]
    %v279 = vld [vmem:[#allocation8 + $0x44] sm:$0xf]
    %v280 = vld [vmem:[#allocation8 + $0x48] sm:$0xf]
    %v281 = vld [vmem:[#allocation8 + $0x4c] sm:$0xf]
    %v282 = vld [vmem:[#allocation8 + $0x50] sm:$0xf]
    %v283 = vld [vmem:[#allocation8 + $0x54] sm:$0xf]
    %v284 = vld [vmem:[#allocation8 + $0x58] sm:$0xf]
    %v285 = vld [vmem:[#allocation8 + $0x5c] sm:$0xf]
    %v286 = vld [vmem:[#allocation8 + $0x60] sm:$0xf]
    %v287 = vld [vmem:[#allocation8 + $0x64] sm:$0xf]
    %v288 = vld [vmem:[#allocation8 + $0x68] sm:$0xf]
    %v289 = vld [vmem:[#allocation8 + $0x6c] sm:$0xf]
    %v290 = vld [vmem:[#allocation8 + $0x70] sm:$0xf]
    %v291 = vld [vmem:[#allocation8 + $0x74] sm:$0xf]
    %v292 = vld [vmem:[#allocation8 + $0x78] sm:$0xf]
    %v293 = vld [vmem:[#allocation8 + $0x7c] sm:$0xf]
    %v294 = vld [vmem:[%s6] sm:$0x1]
    %v296 = vperm.slane %v294, 0
    %v330 = vunpack.c.l.b16 %v262
    %v331 = vunpack.c.l.b16 %v263
    %v332 = vunpack.c.l.b16 %v264
    %v333 = vunpack.c.l.b16 %v265
    %v334 = vunpack.c.l.b16 %v266
    %v335 = vunpack.c.l.b16 %v267
    %v336 = vunpack.c.l.b16 %v268
    %v337 = vunpack.c.l.b16 %v269
    %v338 = vunpack.c.l.b16 %v270
    %v339 = vunpack.c.l.b16 %v271
    %v340 = vunpack.c.l.b16 %v272
    %v341 = vunpack.c.l.b16 %v273
    %v342 = vunpack.c.l.b16 %v274
    %v343 = vunpack.c.l.b16 %v275
    %v344 = vunpack.c.l.b16 %v276
    %v345 = vunpack.c.l.b16 %v277
    %v346 = vunpack.c.l.b16 %v278
    %v347 = vunpack.c.l.b16 %v279
    %v348 = vunpack.c.l.b16 %v280
    %v349 = vunpack.c.l.b16 %v281
    %v350 = vunpack.c.l.b16 %v282
    %v351 = vunpack.c.l.b16 %v283
    %v352 = vunpack.c.l.b16 %v284
    %v353 = vunpack.c.l.b16 %v285
    %v354 = vunpack.c.l.b16 %v286
    %v355 = vunpack.c.l.b16 %v287
    %v356 = vunpack.c.l.b16 %v288
    %v357 = vunpack.c.l.b16 %v289
    %v358 = vunpack.c.l.b16 %v290
    %v359 = vunpack.c.l.b16 %v291
    %v360 = vunpack.c.l.b16 %v292
    %v361 = vunpack.c.l.b16 %v293
    %v362 = vpack.c.b16 %v331, %v330
    %v363 = vpack.c.b16 %v333, %v332
    %v364 = vpack.c.b16 %v335, %v334
    %v365 = vpack.c.b16 %v337, %v336
    %v366 = vpack.c.b16 %v339, %v338
    %v367 = vpack.c.b16 %v341, %v340
    %v368 = vpack.c.b16 %v343, %v342
    %v369 = vpack.c.b16 %v345, %v344
    %v370 = vpack.c.b16 %v347, %v346
    %v371 = vpack.c.b16 %v349, %v348
    %v372 = vpack.c.b16 %v351, %v350
    %v373 = vpack.c.b16 %v353, %v352
    %v374 = vpack.c.b16 %v355, %v354
    %v375 = vpack.c.b16 %v357, %v356
    %v376 = vpack.c.b16 %v359, %v358
    %v377 = vpack.c.b16 %v361, %v360
    %394 = vmatpush.bf16.msra.mxu0 %v369
    %395 = vmatpush.bf16.msra.mxu0 %v368
    %396 = vmatpush.bf16.msra.mxu0 %v367
    %397 = vmatpush.bf16.msra.mxu0 %v366
    %398 = vmatpush.bf16.msra.mxu0 %v365
    %399 = vmatpush.bf16.msra.mxu0 %v364
    %400 = vmatpush.bf16.msra.mxu0 %v363
    %401 = vmatpush.bf16.msra.mxu0 %v362
    %402 = vmatmul.bf16.gmra.mxu0 %v260
    %v403 = vpop.f32.mrf.mxu0
    %v404 = vadd.f32 %v296, %v403
    %v405 = vpop.f32.mrf.mxu0
    %406 = vdwg.mxu0
    %407 = vmatpush.bf16.msra.mxu0 %v377
    %408 = vmatpush.bf16.msra.mxu0 %v376
    %409 = vmatpush.bf16.msra.mxu0 %v375
    %410 = vmatpush.bf16.msra.mxu0 %v374
    %411 = vmatpush.bf16.msra.mxu0 %v373
    %412 = vmatpush.bf16.msra.mxu0 %v372
    %413 = vmatpush.bf16.msra.mxu0 %v371
    %414 = vmatpush.bf16.msra.mxu0 %v370
    %415 = vmatmul.bf16.gmra.mxu0 %v261
    %v416 = vpop.f32.mrf.mxu0
    %v417 = vadd.f32 %v404, %v416
    %v418 = vpop.f32.mrf.mxu0
    %419 = vdwg.mxu0
    %420 = vadd.xlane.f32.xlu0 %v417
    %v421 = vpop.xlane.xlu0 %420
    %v422 = vrot.slane %v421, 4
    %v423 = vadd.f32 %v421, %v422
    %v424 = vrot.slane %v423, 2
    %v425 = vadd.f32 %v423, %v424
    %v426 = vrot.slane %v425, 1
    %v427 = vadd.f32 %v425, %v426
    %s428 = vtos %v427
    %430 = vrot.lane.b32.xlu0 %v417, 1
    %v431 = vpop.permute.xlu0 %430
    %vm433 = vcmask 7168
    %v434 = vsel %vm433, %v431, 0.0
    %435 = vadd.xlane.f32.xlu0 %v434
    %v436 = vpop.xlane.xlu0 %435
    %v437 = vrot.slane %v436, 4
    %v438 = vadd.f32 %v436, %v437
    %v439 = vrot.slane %v438, 2
    %v440 = vadd.f32 %v438, %v439
    %v441 = vrot.slane %v440, 1
    %v442 = vadd.f32 %v440, %v441
    %s443 = vtos %v442
    %s444 = ssub.f32 %s428, %s443
    %s445 = smul.f32 %s444, 0.015625
    %446 = vset.pattern.permute.xlu0 127
    %447 = vperm.xlu0 %446, %v417
    %v448 = vpop.permute.xlu0 %447
    %v450 = vadd.f32 %v448, %v417
    %v451 = vstv %s445
    %v452 = vsub.f32 %v450, %v451
    %453 = vst [vmem:[#allocation10] sm:$0xff] %v452
    // Predicated region
    $region46: #{tpu_custom_call.1} parent=1 // pred_check
      _
    $region47: #{tpu_custom_call.1} parent=1 // pred_check_branch
      %455 = sbr.rel (0) target = $region49
    $region48: #{tpu_custom_call.1} parent=1 // pred_region
      %457 = vsyncadd [#allocation4], 0
      %s459 = sshll.u32 [#allocation10], 4
      %s460 = int_to_ptr.vmem [resolvable:$true] %s459
      %s461 = sshll.u32 %s7, 4
      %s462 = int_to_ptr.hbm [resolvable:$true] %s461
      %464 = dma.vmem_to_hbm [thread:$0]  %s460, 128, %s462, [#allocation4]
    $region49: #{tpu_custom_call.1} parent=1 // pred_fallthru
      _
    // Predicated region
    $region50: #{tpu_custom_call.1} parent=1 // pred_check
      _
    $region51: #{tpu_custom_call.1} parent=1 // pred_check_branch
      %466 = sbr.rel (0) target = $region53
    $region52: #{tpu_custom_call.1} parent=1 // pred_region
      %468 = dma.done [#allocation4], 128
    $region53: #{tpu_custom_call.1} parent=1 // pred_fallthru
      _
    %469 = vsyncpa [#allocation3], 1
    %470 = vsyncpa [#allocation6], 1
    %471 = vsyncpa [#allocation9], 1
    %472 = vsyncpa [#allocation4], 1

</llo_original>
